<compile_context>
chip_gen: v6e
topology: v6e:2x2x1
jax: 0.10.0
libtpu: 0.0.40
codegen_flags: <defaults>
</compile_context>

<pallas_src>
import functools

import numpy as np
import jax
import jax.numpy as jnp
from jax.experimental import pallas as pl
from jax.experimental.pallas import tpu as pltpu


def _round_up(x: int, m: int) -> int:
    return ((x + m - 1) // m) * m


def _choose_tile(n_pad8: int, d_pad: int) -> int:
    """Pick a kernel-matrix tile size that fits the v5e 16 MiB scoped-VMEM default
    (conservative budget, also fine on v6e/v7x defaults) with double-buffered feature DMAs."""
    budget = 10 * 1024 * 1024  # bytes
    if n_pad8 >= 128:
        for t in (512, 256, 128):
            # 2 feature blocks x 2 buffers x (t, d_pad) f32  +  ~4 (t, t) f32 temporaries
            need = 2 * 2 * t * d_pad * 4 + 4 * t * t * 4
            if t <= n_pad8 and need <= budget:
                return t
        return 128
    return n_pad8  # tiny problem: single (n_pad8, n_pad8) block


def _mkmmd_tile_kernel(scale_ref, frow_ref, fcol_ref, out_ref, acc_ref,
                       *, tile, batch, n_valid, bias, alphas):
    bi = pl.program_id(0)
    bj = pl.program_id(1)

    @pl.when((bi == 0) & (bj == 0))
    def _init():
        acc_ref[0] = jnp.float32(bias)

    fr = frow_ref[...]  # (TILE, D_pad) f32, rows of block bi
    fc = fcol_ref[...]  # (TILE, D_pad) f32, rows of block bj

    # Gram block via NT dot_general: contract the lane/D axis of both operands,
    # so no transposed (D, TILE) copy is ever materialized.
    gram = jax.lax.dot_general(
        fr, fc, dimension_numbers=(((1,), (1,)), ((), ())),
        preferred_element_type=jnp.float32)                       # (TILE, TILE)
    sq_r = jnp.sum(fr * fr, axis=-1, keepdims=True)               # (TILE, 1)
    sq_c = jnp.sum(fc * fc, axis=-1, keepdims=True)               # (TILE, 1)
    d2 = jnp.maximum(sq_r + sq_c.T - 2.0 * gram, 0.0)             # clamp cancellation

    s = scale_ref[0]  # 1 / (2 * mean(d2)), precomputed analytically on host
    if tuple(sorted(float(a) for a in alphas)) == (0.5, 1.0, 2.0):
        # alpha=1 -> e ; alpha=0.5 -> e^2 (free VPU mul) ; alpha=2 -> sqrt(e)
        e = jnp.exp(-d2 * s)
        km = e * e + e + jnp.sqrt(e)
    else:
        km = jnp.zeros_like(d2)
        for a in alphas:
            km = km + jnp.exp(-d2 * (s * jnp.float32(1.0 / float(a))))

    # Analytic MK-MMD index weights (non-linear DAN):
    #   same quadrant (SS or TT), off-diagonal : +1 / (B*(B-1))
    #   same quadrant, diagonal                :  0
    #   cross quadrant (ST or TS)              : -1 / B^2
    #   padded rows/cols                       :  0
    rows = bi * tile + jax.lax.broadcasted_iota(jnp.int32, (tile, tile), 0)
    cols = bj * tile + jax.lax.broadcasted_iota(jnp.int32, (tile, tile), 1)
    valid = (rows < n_valid) & (cols < n_valid)
    same_quadrant = (rows < batch) == (cols < batch)
    w_same = jnp.float32(1.0 / float(batch * (batch - 1)))
    w_cross = jnp.float32(-1.0 / float(batch * batch))
    w = jnp.where(same_quadrant,
                  jnp.where(rows == cols, jnp.float32(0.0), w_same),
                  w_cross)
    w = jnp.where(valid, w, jnp.float32(0.0))

    acc_ref[0] += jnp.sum(km * w)
    # Write every step: last grid step leaves the full accumulated loss in the output.
    out_ref[0, 0] = acc_ref[0]


def mkmmd_loss(z_s: jnp.ndarray,
               z_t: jnp.ndarray,
               alphas=(0.5, 1.0, 2.0),
               linear: bool = False) -> jnp.ndarray:
    assert z_s.shape == z_t.shape, "z_s and z_t must have the same shape"
    if linear:
        # TODO(synk): linear DAN variant not supported by the streaming quadrant-weight kernel.
        raise NotImplementedError("linear=True variant is not implemented in the Pallas kernel")

    batch = int(z_s.shape[0])
    feats = jnp.concatenate(
        [z_s.reshape(batch, -1), z_t.reshape(batch, -1)], axis=0
    ).astype(jnp.float32)                                          # (N, D0)
    n_valid, d0 = int(feats.shape[0]), int(feats.shape[1])

    # Pad D to a lane multiple (128) and N to the tile size; padded rows are zero and masked.
    d_pad = _round_up(max(d0, 1), 128)
    n_pad8 = _round_up(n_valid, 8)
    tile = _choose_tile(n_pad8, d_pad)
    n_pad = _round_up(n_valid, tile)
    feats_p = jnp.zeros((n_pad, d_pad), jnp.float32).at[:n_valid, :d0].set(feats)

    # Analytic mean pairwise squared distance (O(N*D) prologue; zero-padded rows don't change it):
    #   sum_{i,j} d2 = 2*N*sum_i ||f_i||^2 - 2*||sum_i f_i||^2
    sum_sq = jnp.sum(feats_p * feats_p)
    col_sum = jnp.sum(feats_p, axis=0)
    sum_d2 = 2.0 * n_valid * sum_sq - 2.0 * jnp.sum(col_sum * col_sum)
    mean_d2 = sum_d2 / jnp.float32(n_valid * n_valid)
    scale = (1.0 / (2.0 * mean_d2)).reshape((1,)).astype(jnp.float32)  # 1/(2*mean(d2))

    bias = 2.0 / float(batch - 1)
    grid = (n_pad // tile, n_pad // tile)

    kernel = functools.partial(
        _mkmmd_tile_kernel,
        tile=tile, batch=batch, n_valid=n_valid, bias=bias, alphas=tuple(alphas))

    out = pl.pallas_call(
        kernel,
        out_shape=jax.ShapeDtypeStruct((1, 1), jnp.float32),
        grid=grid,
        in_specs=[
            pl.BlockSpec(memory_space=pltpu.SMEM),                    # scale (1,) scalar
            pl.BlockSpec((tile, d_pad), lambda i, j: (i, 0)),         # row feature block
            pl.BlockSpec((tile, d_pad), lambda i, j: (j, 0)),         # col feature block
        ],
        out_specs=pl.BlockSpec(memory_space=pltpu.SMEM),              # (1, 1) scalar loss
        scratch_shapes=[pltpu.SMEM((1,), jnp.float32)],               # persistent accumulator
        compiler_params=pltpu.CompilerParams(
            dimension_semantics=("arbitrary", "arbitrary")),
    )(scale, feats_p, feats_p)
    return out[0, 0]


def _reference_loss(z_s, z_t, alphas=(0.5, 1.0, 2.0)):
    """Pure-JAX port of the PyTorch module (non-linear, Gaussian kernels) for validation."""
    b = int(z_s.shape[0])
    f = jnp.concatenate([z_s.reshape(b, -1), z_t.reshape(b, -1)], 0).astype(jnp.float32)
    d2 = jnp.sum((f[:, None, :] - f[None, :, :]) ** 2, axis=-1)
    mean_d2 = jnp.mean(d2)
    km = sum(jnp.exp(-d2 / (2.0 * a * mean_d2)) for a in alphas)
    n = 2 * b
    idx = np.zeros((n, n), np.float32)
    for i in range(b):
        for j in range(b):
            if i != j:
                idx[i, j] = 1.0 / (b * (b - 1))
                idx[i + b, j + b] = 1.0 / (b * (b - 1))
    for i in range(b):
        for j in range(b):
            idx[i, j + b] = -1.0 / (b * b)
            idx[i + b, j] = -1.0 / (b * b)
    return jnp.sum(km * jnp.asarray(idx)) + 2.0 / float(b - 1)


if __name__ == "__main__":
    key = jax.random.PRNGKey(0)
    k1, k2, k3, k4 = jax.random.split(key, 4)

    # Case 1: aligned shapes from the module's docstring example.
    batch, feat_dim = 8, 32
    z_s = jax.random.normal(k1, (batch, feat_dim), dtype=jnp.float32)
    z_t = jax.random.normal(k2, (batch, feat_dim), dtype=jnp.float32)
    loss = mkmmd_loss(z_s, z_t)
    ref = _reference_loss(z_s, z_t)
    jax.block_until_ready(loss)
    assert abs(float(loss) - float(ref)) < 2e-3, (float(loss), float(ref))

    # Case 2: non-aligned shapes to exercise the padding/masking path.
    batch2, feat_dim2 = 6, 40
    z_s2 = jax.random.normal(k3, (batch2, feat_dim2), dtype=jnp.float32)
    z_t2 = jax.random.normal(k4, (batch2, feat_dim2), dtype=jnp.float32)
    loss2 = mkmmd_loss(z_s2, z_t2)
    ref2 = _reference_loss(z_s2, z_t2)
    jax.block_until_ready(loss2)
    assert abs(float(loss2) - float(ref2)) < 2e-3, (float(loss2), float(ref2))

    print("KERNEL_OK")
</pallas_src>

<mosaic_0001>
module attributes {stable_mosaic.version = 11 : i64} {
  func.func @_mkmmd_tile_kernel(%arg0: i32, %arg1: i32, %arg2: memref<1xf32, #tpu.memory_space<smem>>, %arg3: memref<16x128xf32, #tpu.memory_space<vmem>>, %arg4: memref<16x128xf32, #tpu.memory_space<vmem>>, %arg5: memref<1x1xf32, #tpu.memory_space<smem>>, %arg6: memref<1xf32, #tpu.memory_space<smem>>) attributes {dimension_semantics = [#tpu.dimension_semantics<arbitrary>, #tpu.dimension_semantics<arbitrary>], iteration_bounds = array<i64: 1, 1>, scalar_prefetch = 0 : i64, scratch_operands = 1 : i64, tpu.core_type = #tpu.core_type<tc>, window_params = [{transform_indices = @transform_0, window_bounds = array<i64: 1>}, {transform_indices = @transform_1, window_bounds = array<i64: 16, 128>}, {transform_indices = @transform_2, window_bounds = array<i64: 16, 128>}, {transform_indices = @transform_3, window_bounds = array<i64: 1, 1>}]} {
    %c0_i32 = arith.constant 0 : i32
    %0 = arith.cmpi eq, %arg0, %c0_i32 : i32
    %c0_i32_0 = arith.constant 0 : i32
    %1 = arith.cmpi eq, %arg1, %c0_i32_0 : i32
    %2 = arith.andi %0, %1 : i1
    %3 = arith.extui %2 : i1 to i32
    %c0_i32_1 = arith.constant 0 : i32
    %4 = arith.cmpi ne, %3, %c0_i32_1 : i32
    scf.if %4 {
      %cst_26 = arith.constant 0.285714298 : f32
      %c0_27 = arith.constant 0 : index
      %70 = memref.load %arg6[%c0_27] : memref<1xf32, #tpu.memory_space<smem>>
      memref.store %cst_26, %arg6[%c0_27] : memref<1xf32, #tpu.memory_space<smem>>
    } else {
    }
    %c0 = arith.constant 0 : index
    %c0_2 = arith.constant 0 : index
    %5 = vector.load %arg3[%c0, %c0_2] : memref<16x128xf32, #tpu.memory_space<vmem>>, vector<16x128xf32>
    %c0_3 = arith.constant 0 : index
    %c0_4 = arith.constant 0 : index
    %6 = vector.load %arg4[%c0_3, %c0_4] : memref<16x128xf32, #tpu.memory_space<vmem>>, vector<16x128xf32>
    %cst = arith.constant dense<0.000000e+00> : vector<16x16xf32>
    %7 = tpu.matmul %5, %6, %cst {dimension_numbers = #tpu.dot_dimension_numbers<[1], [1], [0], [0], [0, 0, 1, 0], [], []>} : vector<16x128xf32>, vector<16x128xf32>, vector<16x16xf32> -> vector<16x16xf32>
    %8 = arith.mulf %5, %5 : vector<16x128xf32>
    %cst_5 = arith.constant dense<0.000000e+00> : vector<16xf32>
    %9 = vector.multi_reduction <add>, %8, %cst_5 [1] : vector<16x128xf32> to vector<16xf32>
    %10 = vector.shape_cast %9 : vector<16xf32> to vector<16x1xf32>
    %11 = arith.mulf %6, %6 : vector<16x128xf32>
    %cst_6 = arith.constant dense<0.000000e+00> : vector<16xf32>
    %12 = vector.multi_reduction <add>, %11, %cst_6 [1] : vector<16x128xf32> to vector<16xf32>
    %13 = vector.shape_cast %12 : vector<16xf32> to vector<16x1xf32>
    %14 = tpu.transpose %13, [1, 0] : vector<16x1xf32> -> vector<1x16xf32>
    %15 = vector.broadcast %10 : vector<16x1xf32> to vector<16x16xf32>
    %16 = vector.broadcast %14 : vector<1x16xf32> to vector<16x16xf32>
    %17 = arith.addf %15, %16 : vector<16x16xf32>
    %cst_7 = arith.constant 2.000000e+00 : f32
    %18 = vector.broadcast %cst_7 : f32 to vector<16x16xf32>
    %19 = arith.mulf %18, %7 : vector<16x16xf32>
    %20 = arith.subf %17, %19 : vector<16x16xf32>
    %cst_8 = arith.constant 0.000000e+00 : f32
    %21 = vector.broadcast %cst_8 : f32 to vector<16x16xf32>
    %22 = arith.maximumf %20, %21 : vector<16x16xf32>
    %c0_9 = arith.constant 0 : index
    %23 = memref.load %arg2[%c0_9] : memref<1xf32, #tpu.memory_space<smem>>
    %cst_10 = arith.constant 0.000000e+00 : f32
    %24 = vector.broadcast %cst_10 : f32 to vector<16x16xf32>
    %25 = arith.subf %24, %22 : vector<16x16xf32>
    %26 = vector.broadcast %23 : f32 to vector<16x16xf32>
    %27 = arith.mulf %25, %26 : vector<16x16xf32>
    %28 = math.exp %27 : vector<16x16xf32>
    %29 = arith.mulf %28, %28 : vector<16x16xf32>
    %30 = arith.addf %29, %28 : vector<16x16xf32>
    %31 = math.sqrt %28 : vector<16x16xf32>
    %32 = arith.addf %30, %31 : vector<16x16xf32>
    %c16_i32 = arith.constant 16 : i32
    %33 = arith.muli %arg0, %c16_i32 : i32
    %34 = tpu.iota {dimensions = array<i32: 0>} : vector<16x16xi32>
    %35 = vector.broadcast %33 : i32 to vector<16x16xi32>
    %36 = arith.addi %35, %34 : vector<16x16xi32>
    %c16_i32_11 = arith.constant 16 : i32
    %37 = arith.muli %arg1, %c16_i32_11 : i32
    %38 = tpu.iota {dimensions = array<i32: 1>} : vector<16x16xi32>
    %39 = vector.broadcast %37 : i32 to vector<16x16xi32>
    %40 = arith.addi %39, %38 : vector<16x16xi32>
    %c16_i32_12 = arith.constant 16 : i32
    %41 = vector.broadcast %c16_i32_12 : i32 to vector<16x16xi32>
    %42 = arith.cmpi slt, %36, %41 : vector<16x16xi32>
    %c16_i32_13 = arith.constant 16 : i32
    %43 = vector.broadcast %c16_i32_13 : i32 to vector<16x16xi32>
    %44 = arith.cmpi slt, %40, %43 : vector<16x16xi32>
    %45 = arith.andi %42, %44 : vector<16x16xi1>
    %c8_i32 = arith.constant 8 : i32
    %46 = vector.broadcast %c8_i32 : i32 to vector<16x16xi32>
    %47 = arith.cmpi slt, %36, %46 : vector<16x16xi32>
    %c8_i32_14 = arith.constant 8 : i32
    %48 = vector.broadcast %c8_i32_14 : i32 to vector<16x16xi32>
    %49 = arith.cmpi slt, %40, %48 : vector<16x16xi32>
    %50 = arith.xori %47, %49 : vector<16x16xi1>
    %cst_15 = arith.constant dense<true> : vector<16x16xi1>
    %51 = arith.xori %50, %cst_15 : vector<16x16xi1>
    %52 = arith.cmpi eq, %36, %40 : vector<16x16xi32>
    %cst_16 = arith.constant 0.000000e+00 : f32
    %cst_17 = arith.constant 0.0178571437 : f32
    %53 = vector.broadcast %cst_16 : f32 to vector<16x16xf32>
    %54 = vector.broadcast %cst_17 : f32 to vector<16x16xf32>
    %55 = arith.select %52, %53, %54 : vector<16x16xi1>, vector<16x16xf32>
    %cst_18 = arith.constant -1.562500e-02 : f32
    %56 = vector.broadcast %cst_18 : f32 to vector<16x16xf32>
    %57 = arith.select %51, %55, %56 : vector<16x16xi1>, vector<16x16xf32>
    %cst_19 = arith.constant 0.000000e+00 : f32
    %58 = vector.broadcast %cst_19 : f32 to vector<16x16xf32>
    %59 = arith.select %45, %57, %58 : vector<16x16xi1>, vector<16x16xf32>
    %c0_20 = arith.constant 0 : index
    %60 = memref.load %arg6[%c0_20] : memref<1xf32, #tpu.memory_space<smem>>
    %61 = arith.mulf %32, %59 : vector<16x16xf32>
    %62 = vector.shape_cast %61 : vector<16x16xf32> to vector<1x16x16xf32>
    %cst_21 = arith.constant dense<0.000000e+00> : vector<1xf32>
    %63 = vector.multi_reduction <add>, %62, %cst_21 [1, 2] : vector<1x16x16xf32> to vector<1xf32>
    %64 = vector.shape_cast %63 : vector<1xf32> to vector<1x1x1xf32>
    %65 = vector.extract %64[0, 0, 0] : f32 from vector<1x1x1xf32>
    %66 = arith.addf %60, %65 : f32
    %c0_22 = arith.constant 0 : index
    %67 = memref.load %arg6[%c0_22] : memref<1xf32, #tpu.memory_space<smem>>
    memref.store %66, %arg6[%c0_22] : memref<1xf32, #tpu.memory_space<smem>>
    %c0_23 = arith.constant 0 : index
    %68 = memref.load %arg6[%c0_23] : memref<1xf32, #tpu.memory_space<smem>>
    %c0_24 = arith.constant 0 : index
    %c0_25 = arith.constant 0 : index
    %69 = memref.load %arg5[%c0_24, %c0_25] : memref<1x1xf32, #tpu.memory_space<smem>>
    memref.store %68, %arg5[%c0_24, %c0_25] : memref<1x1xf32, #tpu.memory_space<smem>>
    return
  }
  func.func @transform_0(%arg0: i32, %arg1: i32) -> i32 {
    %c0_i32 = arith.constant 0 : i32
    %c0_i32_0 = arith.constant 0 : i32
    return %c0_i32 : i32
  }
  func.func @transform_1(%arg0: i32, %arg1: i32) -> (i32, i32) {
    %c0_i32 = arith.constant 0 : i32
    %c0_i32_0 = arith.constant 0 : i32
    return %arg0, %c0_i32 : i32, i32
  }
  func.func @transform_2(%arg0: i32, %arg1: i32) -> (i32, i32) {
    %c0_i32 = arith.constant 0 : i32
    %c0_i32_0 = arith.constant 0 : i32
    return %arg1, %c0_i32 : i32, i32
  }
  func.func @transform_3(%arg0: i32, %arg1: i32) -> (i32, i32) {
    %c0_i32 = arith.constant 0 : i32
    %c0_i32_0 = arith.constant 0 : i32
    %c0_i32_1 = arith.constant 0 : i32
    return %c0_i32, %c0_i32_0 : i32, i32
  }
}

</mosaic_0001>

<llo_original>
// kernel: tpu_custom_call.1
$region0: #{tpu_custom_call.1}
  #allocation0 [shape = 'u32[]', space=smem, size = 0x4, offset = 0x4, fixed_abs, tag = 'smem constant byte address 0x4 - core index']
  #allocation1 [shape = 'u32[144,128]{1,0:T(1,128)}', space=vmem, size = 0x12000, scoped, tag = 'internal scratch']
  #allocation2 [shape = 'f32[1]{0:T(128)}', space=smem, size = 0x200, scoped, tag = 'scratch operand']
  #allocation3 [shape = 'f32[1]{0:T(128)S(6)}', space=smem, size = 0x200, scoped, tag = 'scoped memory for tpu_custom_call.1']
  %s0 = inlined_call_operand.<no memory space> [shape: f32[1], index: 0, kind: input, shape index: {}]
  %s1 = inlined_call_operand.hbm [shape: f32[16,128], index: 1, kind: input, shape index: {}]
  %s2 = inlined_call_operand.hbm [shape: f32[16,128], index: 2, kind: input, shape index: {}]
  %s3 = inlined_call_operand.hbm [shape: f32[1,1], index: 3, kind: output, shape index: {}]
  %s4 = sld [smem:[#allocation0]]
  $region34: #{tpu_custom_call.1} parent=0
    _
  %s6 = ssub.s32 1, %s4
  %s7 = scalar_select 0, %s6, %s4
  %8 = sst [smem:[#allocation3]] %s0
  $region1: #{tpu_custom_call.1} parent=0
    #allocation4 [shape = 'u8[8192]{0}', space=vmem, size = 0x2000, scoped, tag = 'input window, operand 1, single buffered']
    #allocation5 [shape = 's32[1]{0}', space=sflag, size = 0x4, scoped, tag = 'scoped memory for tpu_custom_call.1']
    #allocation6 [shape = 's32[1]{0}', space=sflag, size = 0x4, scoped, tag = 'scoped memory for tpu_custom_call.1']
    #allocation7 [shape = 'u8[8192]{0}', space=vmem, size = 0x2000, scoped, tag = 'input window, operand 2, single buffered']
    #allocation8 [shape = 's32[1]{0}', space=sflag, size = 0x4, scoped, tag = 'scoped memory for tpu_custom_call.1']
    #allocation9 [shape = 'u8[512]{0}', space=smem, size = 0x200, scoped, tag = 'output window, operand 0, single buffered']
    %9 = vsyncpa [#allocation5], 0
    %10 = vsyncpa [#allocation8], 0
    %11 = vsyncpa [#allocation6], 0
    // Predicated region
    $region2: #{tpu_custom_call.1} parent=1 // pred_check
      _
    $region3: #{tpu_custom_call.1} parent=1 // pred_check_branch
      %13 = sbr.rel (0) target = $region5
    $region4: #{tpu_custom_call.1} parent=1 // pred_region
      _
    $region5: #{tpu_custom_call.1} parent=1 // pred_fallthru
      _
    // Predicated region
    $region6: #{tpu_custom_call.1} parent=1 // pred_check
      _
    $region7: #{tpu_custom_call.1} parent=1 // pred_check_branch
      %15 = sbr.rel (0) target = $region9
    $region8: #{tpu_custom_call.1} parent=1 // pred_region
      %s17 = ssub.s32 256, 256
      %18 = vsyncadd [#allocation5], %s17
      %s19 = sshll.u32 [#allocation4], 4
      %s20 = int_to_ptr.vmem [resolvable:$true] %s19
      %25 = dma.hbm_to_vmem [thread:$0]  %s1, 256, %s20, [#allocation5], 128, 128, 8
    $region9: #{tpu_custom_call.1} parent=1 // pred_fallthru
      _
    // Predicated region
    $region10: #{tpu_custom_call.1} parent=1 // pred_check
      _
    $region11: #{tpu_custom_call.1} parent=1 // pred_check_branch
      %27 = sbr.rel (0) target = $region13
    $region12: #{tpu_custom_call.1} parent=1 // pred_region
      %s29 = ssub.s32 256, 256
      %30 = vsyncadd [#allocation8], %s29
      %s31 = sshll.u32 [#allocation7], 4
      %s32 = int_to_ptr.vmem [resolvable:$true] %s31
      %37 = dma.hbm_to_vmem [thread:$0]  %s2, 256, %s32, [#allocation8], 128, 128, 8
    $region13: #{tpu_custom_call.1} parent=1 // pred_fallthru
      _
    // Predicated region
    $region14: #{tpu_custom_call.1} parent=1 // pred_check
      _
    $region15: #{tpu_custom_call.1} parent=1 // pred_check_branch
      %39 = sbr.rel (0) target = $region17
    $region16: #{tpu_custom_call.1} parent=1 // pred_region
      %40 = dma.done [#allocation5], 256
    $region17: #{tpu_custom_call.1} parent=1 // pred_fallthru
      _
    // Predicated region
    $region18: #{tpu_custom_call.1} parent=1 // pred_check
      _
    $region19: #{tpu_custom_call.1} parent=1 // pred_check_branch
      %42 = sbr.rel (0) target = $region21
    $region20: #{tpu_custom_call.1} parent=1 // pred_region
      %43 = dma.done [#allocation8], 256
    $region21: #{tpu_custom_call.1} parent=1 // pred_fallthru
      _
    %p44 = scmp.eq.s32.totalorder 0, 0
    %p45 = scmp.eq.s32.totalorder 0, 0
    %p46 = pnand %p44, %p45
    %p47 = pneg %p46
    // Predicated region
    $region22: #{tpu_custom_call.1} parent=1 // pred_check
      _
    $region23: #{tpu_custom_call.1} parent=1 // pred_check_branch
      %49 = sbr.rel (%p46) target = $region25
    $region24: #{tpu_custom_call.1} parent=1 // pred_region
      %s50 = scalar_lea.smem [#allocation2], 0
      %51 = sst [smem:[%s50]] 0.2857143
    $region25: #{tpu_custom_call.1} parent=1 // pred_fallthru
      _
    %v52 = vld [vmem:[#allocation4] sm:$0xff]
    %v53 = vld [vmem:[#allocation4 + $0x8] sm:$0xff]
    %v54 = vld [vmem:[#allocation7] sm:$0xff]
    %v55 = vld [vmem:[#allocation7 + $0x8] sm:$0xff]
    %56 = vmatprep.subr.mxu0 0.0
    %57 = vmatpush1.xpose.msra.mxu0 0.0
    %58 = vmatprep.subr.mxu0 0.0
    %59 = vmatpush1.xpose.msra.mxu0 0.0
    %60 = vmatprep.subr.mxu0 0.0
    %61 = vmatpush1.xpose.msra.mxu0 0.0
    %62 = vmatprep.subr.mxu0 0.0
    %63 = vmatpush1.xpose.msra.mxu0 0.0
    %64 = vmatprep.subr.mxu0 0.0
    %65 = vmatpush1.xpose.msra.mxu0 0.0
    %66 = vmatprep.subr.mxu0 0.0
    %67 = vmatpush1.xpose.msra.mxu0 0.0
    %68 = vmatprep.subr.mxu0 0.0
    %69 = vmatpush1.xpose.msra.mxu0 0.0
    %70 = vmatprep.subr.mxu0 0.0
    %71 = vmatpush1.xpose.msra.mxu0 0.0
    %72 = vmatprep.subr.mxu0 0.0
    %73 = vmatpush1.xpose.msra.mxu0 0.0
    %74 = vmatprep.subr.mxu0 0.0
    %75 = vmatpush1.xpose.msra.mxu0 0.0
    %76 = vmatprep.subr.mxu0 0.0
    %77 = vmatpush1.xpose.msra.mxu0 0.0
    %78 = vmatprep.subr.mxu0 0.0
    %79 = vmatpush1.xpose.msra.mxu0 0.0
    %80 = vmatprep.subr.mxu0 0.0
    %81 = vmatpush1.xpose.msra.mxu0 0.0
    %82 = vmatprep.subr.mxu0 0.0
    %83 = vmatpush1.xpose.msra.mxu0 0.0
    %84 = vmatprep.subr.mxu0 0.0
    %85 = vmatpush1.xpose.msra.mxu0 %v55
    %86 = vmatprep.subr.mxu0 0.0
    %87 = vmatpush1.xpose.msra.mxu0 %v54
    %88 = vmatprep.subr.mxu0 0.0
    %89 = vmatpush2.xpose.msra.mxu0 0.0
    %90 = vmatprep.subr.mxu0 0.0
    %91 = vmatpush2.xpose.msra.mxu0 0.0
    %92 = vmatprep.subr.mxu0 0.0
    %93 = vmatpush2.xpose.msra.mxu0 0.0
    %94 = vmatprep.subr.mxu0 0.0
    %95 = vmatpush2.xpose.msra.mxu0 0.0
    %96 = vmatprep.subr.mxu0 0.0
    %97 = vmatpush2.xpose.msra.mxu0 0.0
    %98 = vmatprep.subr.mxu0 0.0
    %99 = vmatpush2.xpose.msra.mxu0 0.0
    %100 = vmatprep.subr.mxu0 0.0
    %101 = vmatpush2.xpose.msra.mxu0 0.0
    %102 = vmatprep.subr.mxu0 0.0
    %103 = vmatpush2.xpose.msra.mxu0 0.0
    %104 = vmatprep.subr.mxu0 0.0
    %105 = vmatpush2.xpose.msra.mxu0 0.0
    %106 = vmatprep.subr.mxu0 0.0
    %107 = vmatpush2.xpose.msra.mxu0 0.0
    %108 = vmatprep.subr.mxu0 0.0
    %109 = vmatpush2.xpose.msra.mxu0 0.0
    %110 = vmatprep.subr.mxu0 0.0
    %111 = vmatpush2.xpose.msra.mxu0 0.0
    %112 = vmatprep.subr.mxu0 0.0
    %113 = vmatpush2.xpose.msra.mxu0 0.0
    %114 = vmatprep.subr.mxu0 0.0
    %115 = vmatpush2.xpose.msra.mxu0 0.0
    %116 = vmatprep.subr.mxu0 0.0
    %117 = vmatpush2.xpose.msra.mxu0 0.0
    %118 = vmatprep.subr.mxu0 0.0
    %119 = vmatpush2.xpose.msra.mxu0 0.0
    %120 = vmatprep.mubr.f32.mxu0 0.0
    %121 = vmatmul.mubr.f32.gmra.mxu0 %v52
    %v122 = vpop.f32.mrf.mxu0
    %v123 = vadd.f32 0.0, %v122
    %v124 = vpop.f32.mrf.mxu0
    %125 = vmatprep.mubr.f32.mxu0 0.0
    %126 = vmatmul.mubr.f32.gmra.mxu0 %v53
    %v127 = vpop.f32.mrf.mxu0
    %v128 = vadd.f32 0.0, %v127
    %v129 = vpop.f32.mrf.mxu0
    %130 = vdwg.mxu0
    %v131 = vmul.f32 %v52, %v52
    %v132 = vmul.f32 %v53, %v53
    %133 = vadd.xlane.f32.xlu0 %v131
    %v134 = vpop.xlane.xlu0 %133
    %135 = vadd.xlane.f32.xlu0 %v132
    %v136 = vpop.xlane.xlu0 %135
    %v137 = vmul.f32 %v54, %v54
    %v138 = vmul.f32 %v55, %v55
    %139 = vadd.xlane.f32.xlu0 %v137
    %v140 = vpop.xlane.xlu0 %139
    %141 = vadd.xlane.f32.xlu0 %v138
    %v142 = vpop.xlane.xlu0 %141
    %143 = vxpose.xlu0.b32.start [1/16] %v140, 128
    %144 = vxpose.xlu0.b32.cont [2/16] %v142, 128
    %145 = vxpose.xlu0.b32.cont [3/16] 0.0, 128
    %146 = vxpose.xlu0.b32.cont [4/16] 0.0, 128
    %147 = vxpose.xlu0.b32.cont [5/16] 0.0, 128
    %148 = vxpose.xlu0.b32.cont [6/16] 0.0, 128
    %149 = vxpose.xlu0.b32.cont [7/16] 0.0, 128
    %150 = vxpose.xlu0.b32.cont [8/16] 0.0, 128
    %151 = vxpose.xlu0.b32.cont [9/16] 0.0, 128
    %152 = vxpose.xlu0.b32.cont [10/16] 0.0, 128
    %153 = vxpose.xlu0.b32.cont [11/16] 0.0, 128
    %154 = vxpose.xlu0.b32.cont [12/16] 0.0, 128
    %155 = vxpose.xlu0.b32.cont [13/16] 0.0, 128
    %156 = vxpose.xlu0.b32.cont [14/16] 0.0, 128
    %157 = vxpose.xlu0.b32.cont [15/16] 0.0, 128
    %158 = vxpose.xlu0.b32.end [16/16] 0.0, 128
    %v159 = vpop.trf.xlu0
    %v160 = vpop.trf.xlu0
    %v161 = vpop.trf.xlu0
    %v162 = vpop.trf.xlu0
    %v163 = vpop.trf.xlu0
    %v164 = vpop.trf.xlu0
    %v165 = vpop.trf.xlu0
    %v166 = vpop.trf.xlu0
    %v167 = vpop.trf.xlu0
    %v168 = vpop.trf.xlu0
    %v169 = vpop.trf.xlu0
    %v170 = vpop.trf.xlu0
    %v171 = vpop.trf.xlu0
    %v172 = vpop.trf.xlu0
    %v173 = vpop.trf.xlu0
    %v174 = vpop.trf.xlu0
    %v175 = vlaneseq
    %v176 = vshrl.u32 %v175, 7
    %v177 = vsub.s32 0, %v176
    %v178 = vrot.slane %v159, %v177
    %v179 = vadd.f32 %v134, %v178
    %v180 = vadd.f32 %v136, %v178
    %v181 = vmul.f32 %v123, 2.0
    %v182 = vmul.f32 %v128, 2.0
    %v183 = vsub.f32 %v179, %v181
    %v184 = vsub.f32 %v180, %v182
    %v185 = vmax.f32 %v183, 0.0
    %v186 = vmax.f32 %v184, 0.0
    %s187 = sld [smem:[#allocation3]]
    %v188 = vsub.f32 0.0, %v185
    %v189 = vsub.f32 0.0, %v186
    %v190 = vstv %s187
    %v191 = vmul.f32 %v188, %v190
    %v192 = vmul.f32 %v189, %v190
    %v193 = vmul.f32 %v191, 1.442695
    %v194 = vpow.pop %v193
    %v195 = vmul.f32 %v192, 1.442695
    %v196 = vpow.pop %v195
    %v197 = vmul.f32 %v194, %v194
    %v198 = vmul.f32 %v196, %v196
    %v199 = vadd.f32 %v197, %v194
    %v200 = vadd.f32 %v198, %v196
    %v201 = vrsqrt.pop %v194
    %v202 = vmul.f32 %v194, %v201
    %vm203 = vcmp.eq.f32.partialorder %v194, inf
    %v204 = vsel %vm203, %v194, %v202
    %vm205 = vcmp.eq.f32.partialorder %v194, 0.0
    %v206 = vand.u32 %v194, 2147483648
    %v207 = vsel %vm205, %v206, %v204
    %v208 = vrsqrt.pop %v196
    %v209 = vmul.f32 %v196, %v208
    %vm210 = vcmp.eq.f32.partialorder %v196, inf
    %v211 = vsel %vm210, %v196, %v209
    %vm212 = vcmp.eq.f32.partialorder %v196, 0.0
    %v213 = vand.u32 %v196, 2147483648
    %v214 = vsel %vm212, %v213, %v211
    %v215 = vadd.f32 %v199, %v207
    %v216 = vadd.f32 %v200, %v214
    %s217 = smul.u32 0, 16
    %v218 = vlaneseq
    %v219 = vshrl.u32 %v218, 7
    %v220 = vadd.s32 %v219, 8
    %v221 = vstv %s217
    %v222 = vadd.s32 %v221, %v219
    %v223 = vadd.s32 %v221, %v220
    %s224 = smul.u32 0, 16
    %v225 = vlaneseq
    %v226 = vand.u32 %v225, 127
    %v227 = vstv %s224
    %v228 = vadd.s32 %v227, %v226
    %vm229 = vcmp.lt.s32.totalorder %v222, 16
    %vm230 = vcmp.lt.s32.totalorder %v223, 16
    %vm231 = vcmp.lt.s32.totalorder %v228, 16
    %vm232 = vmand %vm229, %vm231
    %vm233 = vmand %vm230, %vm231
    %vm234 = vcmp.lt.s32.totalorder %v222, 8
    %vm235 = vcmp.lt.s32.totalorder %v223, 8
    %vm236 = vcmp.lt.s32.totalorder %v228, 8
    %vm237 = vmxor %vm234, %vm236
    %vm238 = vmxor %vm235, %vm236
    %vm239 = vmxor %vm237, 1
    %vm240 = vmxor %vm238, 1
    %vm241 = vcmp.eq.s32.totalorder %v222, %v228
    %vm242 = vcmp.eq.s32.totalorder %v223, %v228
    %v243 = vsel %vm241, 0.0, 0.017857144
    %v244 = vsel %vm242, 0.0, 0.017857144
    %v245 = vsel %vm239, %v243, -0.015625
    %v246 = vsel %vm240, %v244, -0.015625
    %v247 = vsel %vm232, %v245, 0.0
    %v248 = vsel %vm233, %v246, 0.0
    %s249 = sld [smem:[#allocation2]]
    %v250 = vmul.f32 %v215, %v247
    %v251 = vmul.f32 %v216, %v248
    %vm252 = vcmask 130048
    %v253 = vsel %vm252, %v250, 0.0
    %v254 = vsel %vm252, %v251, 0.0
    %v255 = vadd.f32 %v253, %v254
    %256 = vadd.xlane.f32.xlu0 %v255
    %v257 = vpop.xlane.xlu0 %256
    %v258 = vrot.slane %v257, 4
    %v259 = vadd.f32 %v257, %v258
    %v260 = vrot.slane %v259, 2
    %v261 = vadd.f32 %v259, %v260
    %v262 = vrot.slane %v261, 1
    %v263 = vadd.f32 %v261, %v262
    %s264 = vtos %v263
    %s265 = sadd.f32 %s249, %s264
    %s266 = scalar_lea.smem [#allocation2], 0
    %267 = sst [smem:[%s266]] %s265
    %s268 = sld [smem:[#allocation2]]
    %s269 = scalar_lea.smem [#allocation9], 0
    %270 = sst [smem:[%s269]] %s268
    // Predicated region
    $region26: #{tpu_custom_call.1} parent=1 // pred_check
      _
    $region27: #{tpu_custom_call.1} parent=1 // pred_check_branch
      %272 = sbr.rel (0) target = $region29
    $region28: #{tpu_custom_call.1} parent=1 // pred_region
      %s274 = ssub.s32 16, 16
      %275 = vsyncadd [#allocation6], %s274
      %278 = dma.smem_to_hbm [#allocation9], 16, %s3, [#allocation6]
    $region29: #{tpu_custom_call.1} parent=1 // pred_fallthru
      _
    // Predicated region
    $region30: #{tpu_custom_call.1} parent=1 // pred_check
      _
    $region31: #{tpu_custom_call.1} parent=1 // pred_check_branch
      %280 = sbr.rel (0) target = $region33
    $region32: #{tpu_custom_call.1} parent=1 // pred_region
      %281 = dma.done [#allocation6], 16
    $region33: #{tpu_custom_call.1} parent=1 // pred_fallthru
      _
    %282 = sfence
    %283 = vsyncpa [#allocation5], 1
    %284 = vsyncpa [#allocation8], 1
    %285 = vsyncpa [#allocation6], 1

</llo_original>
